<compile_context>
chip_gen: v6e
topology: v6e:2x2x1
jax: 0.10.0
libtpu: 0.0.40
codegen_flags: <defaults>
</compile_context>

<pallas_src>
import jax
import jax.numpy as jnp
from jax.experimental import pallas as pl
from jax.experimental.pallas import tpu as pltpu


def _round_up(x, m):
    return ((x + m - 1) // m) * m


def qnet_kernel(x_ref, w1_ref, b1_ref, w2_ref, b2_ref, o_ref):
    # fc1: (TB, S_pad) @ (S_pad, H_pad) + (1, H_pad) -> ReLU (f32, full vregs)
    h = jnp.dot(x_ref[...], w1_ref[...], preferred_element_type=jnp.float32)
    h = jnp.maximum(h + b1_ref[...], 0.0)
    # fc2: (TB, H_pad) @ (H_pad, A_pad) + (1, A_pad) -> lane-dense store
    out = jnp.dot(h, w2_ref[...], preferred_element_type=jnp.float32)
    o_ref[...] = (out + b2_ref[...]).astype(o_ref.dtype)
    # Note: keeping f32 everywhere for exact parity with the torch module; on
    # v6e/v7x the two dots could be fed bf16 inputs (f32 accumulate) to halve
    # the x DMA bytes at large batch.


def qnet_forward(x, w1, b1, w2, b2, *, block_b=512):
    """x: (B, S) f32; W1:(S,H), b1:(1,H), W2:(H,A), b2:(1,A); returns (B, A) f32."""
    B, S = x.shape
    S_w, H = w1.shape
    H_w, A = w2.shape
    assert S_w == S and H_w == H and b1.shape[-1] == H and b2.shape[-1] == A

    # ---- pad once in the wrapper to (8,128)-friendly shapes -----------------
    S_pad = _round_up(S, 8)      # sublane-friendly contraction dim for fc1
    H_pad = _round_up(H, 128)    # clean MXU tiles; bias+ReLU on full vregs
    A_pad = _round_up(A, 128)    # lane-dense output stores (unmasked vst)

    # Batch tile: stream x / out, weights resident.  TB is a multiple of 8.
    TB = block_b if B >= block_b else _round_up(B, 8)
    B_pad = _round_up(B, TB)
    grid_b = B_pad // TB

    f32 = jnp.float32
    x_p = jnp.zeros((B_pad, S_pad), f32).at[:B, :S].set(x.astype(f32))
    w1_p = jnp.zeros((S_pad, H_pad), f32).at[:S, :H].set(w1.astype(f32))
    b1_p = jnp.zeros((1, H_pad), f32).at[:, :H].set(b1.reshape(1, H).astype(f32))
    w2_p = jnp.zeros((H_pad, A_pad), f32).at[:H, :A].set(w2.astype(f32))
    b2_p = jnp.zeros((1, A_pad), f32).at[:, :A].set(b2.reshape(1, A).astype(f32))

    flops = 2 * B_pad * (S_pad * H_pad + H_pad * A_pad)
    bytes_accessed = 4 * (
        x_p.size + w1_p.size + b1_p.size + w2_p.size + b2_p.size + B_pad * A_pad
    )

    out_p = pl.pallas_call(
        qnet_kernel,
        out_shape=jax.ShapeDtypeStruct((B_pad, A_pad), f32),
        grid=(grid_b,),
        in_specs=[
            pl.BlockSpec((TB, S_pad), lambda i: (i, 0)),     # x streams per tile
            pl.BlockSpec((S_pad, H_pad), lambda i: (0, 0)),  # W1 resident
            pl.BlockSpec((1, H_pad), lambda i: (0, 0)),      # b1 resident
            pl.BlockSpec((H_pad, A_pad), lambda i: (0, 0)),  # W2 resident
            pl.BlockSpec((1, A_pad), lambda i: (0, 0)),      # b2 resident
        ],
        out_specs=pl.BlockSpec((TB, A_pad), lambda i: (i, 0)),
        compiler_params=pltpu.CompilerParams(
            # Batch tiles are independent: shard across TCs on v7x megacore.
            dimension_semantics=("parallel",),
        ),
        cost_estimate=pl.CostEstimate(
            flops=flops, transcendentals=0, bytes_accessed=bytes_accessed
        ),
    )(x_p, w1_p, b1_p, w2_p, b2_p)

    # Strip batch / action padding.
    return out_p[:B, :A]


def init_qnet_params(key, state_dim, hidden_dim, action_dim):
    """Mimics torch.nn.Linear init (uniform +/- 1/sqrt(fan_in)), weights stored
    as (in_features, out_features)."""
    k1, k2, k3, k4 = jax.random.split(key, 4)
    bound1 = 1.0 / jnp.sqrt(jnp.float32(state_dim))
    bound2 = 1.0 / jnp.sqrt(jnp.float32(hidden_dim))
    w1 = jax.random.uniform(k1, (state_dim, hidden_dim), jnp.float32, -bound1, bound1)
    b1 = jax.random.uniform(k2, (1, hidden_dim), jnp.float32, -bound1, bound1)
    w2 = jax.random.uniform(k3, (hidden_dim, action_dim), jnp.float32, -bound2, bound2)
    b2 = jax.random.uniform(k4, (1, action_dim), jnp.float32, -bound2, bound2)
    return w1, b1, w2, b2


def _reference(x, w1, b1, w2, b2):
    return jnp.maximum(x @ w1 + b1, 0.0) @ w2 + b2


if __name__ == "__main__":
    # Shapes consistent with the original module: hidden_dim = 128 (from dqn.py),
    # small MicroGrid-like observation/action spaces.
    batch, state_dim, hidden_dim, action_dim = 8, 6, 128, 5

    key = jax.random.PRNGKey(0)
    k_x, k_p, k_x2 = jax.random.split(key, 3)
    x = jax.random.normal(k_x, (batch, state_dim), jnp.float32)
    w1, b1, w2, b2 = init_qnet_params(k_p, state_dim, hidden_dim, action_dim)

    # Small-batch call (single grid step).
    out = qnet_forward(x, w1, b1, w2, b2)
    out = jax.block_until_ready(out)
    ref = _reference(x, w1, b1, w2, b2)
    assert out.shape == (batch, action_dim)
    assert jnp.allclose(out, ref, atol=1e-5, rtol=1e-5)

    # Multi-tile call: exercises the batch grid (+ batch padding) with a small
    # block size so grid > 1, as used for real replay-batch / vmapped-env sizes.
    x2 = jax.random.normal(k_x2, (40, state_dim), jnp.float32)
    out2 = qnet_forward(x2, w1, b1, w2, b2, block_b=16)
    out2 = jax.block_until_ready(out2)
    ref2 = _reference(x2, w1, b1, w2, b2)
    assert out2.shape == (40, action_dim)
    assert jnp.allclose(out2, ref2, atol=1e-5, rtol=1e-5)

    print("KERNEL_OK")
</pallas_src>

<mosaic_0001>
module attributes {stable_mosaic.version = 11 : i64} {
  func.func @qnet_kernel(%arg0: i32, %arg1: memref<8x8xf32, #tpu.memory_space<vmem>>, %arg2: memref<8x128xf32, #tpu.memory_space<vmem>>, %arg3: memref<1x128xf32, #tpu.memory_space<vmem>>, %arg4: memref<128x128xf32, #tpu.memory_space<vmem>>, %arg5: memref<1x128xf32, #tpu.memory_space<vmem>>, %arg6: memref<8x128xf32, #tpu.memory_space<vmem>>) attributes {dimension_semantics = [#tpu.dimension_semantics<parallel>], iteration_bounds = array<i64: 1>, scalar_prefetch = 0 : i64, scratch_operands = 0 : i64, tpu.core_type = #tpu.core_type<tc>, window_params = [{transform_indices = @transform_0, window_bounds = array<i64: 8, 8>}, {pipeline_mode = #tpu.pipeline_mode<synchronous>, transform_indices = @transform_1, window_bounds = array<i64: 8, 128>}, {pipeline_mode = #tpu.pipeline_mode<synchronous>, transform_indices = @transform_2, window_bounds = array<i64: 1, 128>}, {pipeline_mode = #tpu.pipeline_mode<synchronous>, transform_indices = @transform_3, window_bounds = array<i64: 128, 128>}, {pipeline_mode = #tpu.pipeline_mode<synchronous>, transform_indices = @transform_4, window_bounds = array<i64: 1, 128>}, {transform_indices = @transform_5, window_bounds = array<i64: 8, 128>}]} {
    %c0 = arith.constant 0 : index
    %c0_0 = arith.constant 0 : index
    %0 = vector.load %arg1[%c0, %c0_0] : memref<8x8xf32, #tpu.memory_space<vmem>>, vector<8x8xf32>
    %c0_1 = arith.constant 0 : index
    %c0_2 = arith.constant 0 : index
    %1 = vector.load %arg2[%c0_1, %c0_2] : memref<8x128xf32, #tpu.memory_space<vmem>>, vector<8x128xf32>
    %cst = arith.constant dense<0.000000e+00> : vector<8x128xf32>
    %2 = tpu.matmul %0, %1, %cst {dimension_numbers = #tpu.dot_dimension_numbers<[1], [0], [0], [1], [0, 0, 1, 1], [], []>} : vector<8x8xf32>, vector<8x128xf32>, vector<8x128xf32> -> vector<8x128xf32>
    %c0_3 = arith.constant 0 : index
    %c0_4 = arith.constant 0 : index
    %3 = vector.load %arg3[%c0_3, %c0_4] : memref<1x128xf32, #tpu.memory_space<vmem>>, vector<1x128xf32>
    %4 = vector.broadcast %3 : vector<1x128xf32> to vector<8x128xf32>
    %5 = arith.addf %2, %4 : vector<8x128xf32>
    %cst_5 = arith.constant 0.000000e+00 : f32
    %6 = vector.broadcast %cst_5 : f32 to vector<8x128xf32>
    %7 = arith.maximumf %5, %6 : vector<8x128xf32>
    %c0_6 = arith.constant 0 : index
    %c0_7 = arith.constant 0 : index
    %8 = vector.load %arg4[%c0_6, %c0_7] : memref<128x128xf32, #tpu.memory_space<vmem>>, vector<128x128xf32>
    %cst_8 = arith.constant dense<0.000000e+00> : vector<8x128xf32>
    %9 = tpu.matmul %7, %8, %cst_8 {dimension_numbers = #tpu.dot_dimension_numbers<[1], [0], [0], [1], [0, 0, 1, 1], [], []>} : vector<8x128xf32>, vector<128x128xf32>, vector<8x128xf32> -> vector<8x128xf32>
    %c0_9 = arith.constant 0 : index
    %c0_10 = arith.constant 0 : index
    %10 = vector.load %arg5[%c0_9, %c0_10] : memref<1x128xf32, #tpu.memory_space<vmem>>, vector<1x128xf32>
    %11 = vector.broadcast %10 : vector<1x128xf32> to vector<8x128xf32>
    %12 = arith.addf %9, %11 : vector<8x128xf32>
    %c0_11 = arith.constant 0 : index
    %c0_12 = arith.constant 0 : index
    %13 = vector.load %arg6[%c0_11, %c0_12] : memref<8x128xf32, #tpu.memory_space<vmem>>, vector<8x128xf32>
    tpu.vector_store %arg6[%c0_11, %c0_12], %12 {strides = array<i32>} : memref<8x128xf32, #tpu.memory_space<vmem>>, vector<8x128xf32>,
    return
  }
  func.func @transform_0(%arg0: i32) -> (i32, i32) {
    %c0_i32 = arith.constant 0 : i32
    %c0_i32_0 = arith.constant 0 : i32
    return %arg0, %c0_i32 : i32, i32
  }
  func.func @transform_1(%arg0: i32) -> (i32, i32) {
    %c0_i32 = arith.constant 0 : i32
    %c0_i32_0 = arith.constant 0 : i32
    %c0_i32_1 = arith.constant 0 : i32
    return %c0_i32, %c0_i32_0 : i32, i32
  }
  func.func @transform_2(%arg0: i32) -> (i32, i32) {
    %c0_i32 = arith.constant 0 : i32
    %c0_i32_0 = arith.constant 0 : i32
    %c0_i32_1 = arith.constant 0 : i32
    return %c0_i32, %c0_i32_0 : i32, i32
  }
  func.func @transform_3(%arg0: i32) -> (i32, i32) {
    %c0_i32 = arith.constant 0 : i32
    %c0_i32_0 = arith.constant 0 : i32
    %c0_i32_1 = arith.constant 0 : i32
    return %c0_i32, %c0_i32_0 : i32, i32
  }
  func.func @transform_4(%arg0: i32) -> (i32, i32) {
    %c0_i32 = arith.constant 0 : i32
    %c0_i32_0 = arith.constant 0 : i32
    %c0_i32_1 = arith.constant 0 : i32
    return %c0_i32, %c0_i32_0 : i32, i32
  }
  func.func @transform_5(%arg0: i32) -> (i32, i32) {
    %c0_i32 = arith.constant 0 : i32
    %c0_i32_0 = arith.constant 0 : i32
    return %arg0, %c0_i32 : i32, i32
  }
}

</mosaic_0001>

<llo_original>
// kernel: tpu_custom_call.1
$region0: #{tpu_custom_call.1}
  #allocation0 [shape = 'u32[]', space=smem, size = 0x4, offset = 0x4, fixed_abs, tag = 'smem constant byte address 0x4 - core index']
  #allocation1 [shape = 'u32[144,128]{1,0:T(1,128)}', space=vmem, size = 0x12000, scoped, tag = 'internal scratch']
  %s0 = inlined_call_operand.hbm [shape: f32[8,8], index: 0, kind: input, shape index: {}]
  %s1 = inlined_call_operand.hbm [shape: f32[8,128], index: 1, kind: input, shape index: {}]
  %s2 = inlined_call_operand.vmem [shape: f32[1,128], index: 2, kind: input, shape index: {}]
  %s3 = inlined_call_operand.hbm [shape: f32[128,128], index: 3, kind: input, shape index: {}]
  %s4 = inlined_call_operand.vmem [shape: f32[1,128], index: 4, kind: input, shape index: {}]
  %s5 = inlined_call_operand.hbm [shape: f32[8,128], index: 5, kind: output, shape index: {}]
  %s6 = sld [smem:[#allocation0]]
  $region42: #{tpu_custom_call.1} parent=0
    _
  %s8 = ssub.s32 1, %s6
  %s9 = scalar_select 0, %s8, %s6
  $region1: #{tpu_custom_call.1} parent=0
    #allocation2 [shape = 'u8[4096]{0}', space=vmem, size = 0x1000, scoped, tag = 'input window, operand 0, single buffered']
    #allocation3 [shape = 's32[1]{0}', space=sflag, size = 0x4, scoped, tag = 'scoped memory for tpu_custom_call.1']
    #allocation4 [shape = 's32[1]{0}', space=sflag, size = 0x4, scoped, tag = 'scoped memory for tpu_custom_call.1']
    #allocation5 [shape = 'u8[4096]{0}', space=vmem, size = 0x1000, scoped, tag = 'input window, operand 1, single buffered']
    #allocation6 [shape = 's32[1]{0}', space=sflag, size = 0x4, scoped, tag = 'scoped memory for tpu_custom_call.1']
    #allocation7 [shape = 'u8[65536]{0}', space=vmem, size = 0x10000, scoped, tag = 'input window, operand 3, single buffered']
    #allocation8 [shape = 'u8[4096]{0}', space=vmem, size = 0x1000, scoped, tag = 'output window, operand 0, single buffered']
    %10 = vsyncpa [#allocation3], 0
    %11 = vsyncpa [#allocation6], 0
    %12 = vsyncpa [#allocation4], 0
    // Predicated region
    $region2: #{tpu_custom_call.1} parent=1 // pred_check
      _
    $region3: #{tpu_custom_call.1} parent=1 // pred_check_branch
      %14 = sbr.rel (0) target = $region5
    $region4: #{tpu_custom_call.1} parent=1 // pred_region
      %s16 = ssub.s32 128, 128
      %17 = vsyncadd [#allocation3], %s16
      %s19 = sshll.u32 [#allocation2], 4
      %s20 = int_to_ptr.vmem [resolvable:$true] %s19
      %22 = dma.hbm_to_vmem [thread:$0]  %s0, 128, %s20, [#allocation3]
    $region5: #{tpu_custom_call.1} parent=1 // pred_fallthru
      _
    // Predicated region
    $region6: #{tpu_custom_call.1} parent=1 // pred_check
      _
    $region7: #{tpu_custom_call.1} parent=1 // pred_check_branch
      %24 = sbr.rel (0) target = $region9
    $region8: #{tpu_custom_call.1} parent=1 // pred_region
      %s26 = ssub.s32 128, 128
      %27 = vsyncadd [#allocation6], %s26
      %s29 = sshll.u32 [#allocation5], 4
      %s30 = int_to_ptr.vmem [resolvable:$true] %s29
      %32 = dma.hbm_to_vmem [thread:$0]  %s1, 128, %s30, [#allocation6]
    $region9: #{tpu_custom_call.1} parent=1 // pred_fallthru
      _
    // Predicated region
    $region10: #{tpu_custom_call.1} parent=1 // pred_check
      _
    $region11: #{tpu_custom_call.1} parent=1 // pred_check_branch
      %34 = sbr.rel (0) target = $region13
    $region12: #{tpu_custom_call.1} parent=1 // pred_region
      _
    $region13: #{tpu_custom_call.1} parent=1 // pred_fallthru
      _
    // Predicated region
    $region14: #{tpu_custom_call.1} parent=1 // pred_check
      _
    $region15: #{tpu_custom_call.1} parent=1 // pred_check_branch
      %36 = sbr.rel (0) target = $region17
    $region16: #{tpu_custom_call.1} parent=1 // pred_region
      %s38 = ssub.s32 2048, 2048
      %39 = vsyncadd [#allocation6], %s38
      %s40 = sshll.u32 [#allocation7], 4
      %s41 = int_to_ptr.vmem [resolvable:$true] %s40
      %46 = dma.hbm_to_vmem [thread:$0]  %s3, 2048, %s41, [#allocation6], 128, 128, 8
    $region17: #{tpu_custom_call.1} parent=1 // pred_fallthru
      _
    // Predicated region
    $region18: #{tpu_custom_call.1} parent=1 // pred_check
      _
    $region19: #{tpu_custom_call.1} parent=1 // pred_check_branch
      %48 = sbr.rel (0) target = $region21
    $region20: #{tpu_custom_call.1} parent=1 // pred_region
      _
    $region21: #{tpu_custom_call.1} parent=1 // pred_fallthru
      _
    // Predicated region
    $region22: #{tpu_custom_call.1} parent=1 // pred_check
      _
    $region23: #{tpu_custom_call.1} parent=1 // pred_check_branch
      %50 = sbr.rel (0) target = $region25
    $region24: #{tpu_custom_call.1} parent=1 // pred_region
      %51 = dma.done [#allocation3], 128
    $region25: #{tpu_custom_call.1} parent=1 // pred_fallthru
      _
    // Predicated region
    $region26: #{tpu_custom_call.1} parent=1 // pred_check
      _
    $region27: #{tpu_custom_call.1} parent=1 // pred_check_branch
      %53 = sbr.rel (0) target = $region29
    $region28: #{tpu_custom_call.1} parent=1 // pred_region
      %54 = dma.done [#allocation6], 128
    $region29: #{tpu_custom_call.1} parent=1 // pred_fallthru
      _
    // Predicated region
    $region30: #{tpu_custom_call.1} parent=1 // pred_check
      _
    $region31: #{tpu_custom_call.1} parent=1 // pred_check_branch
      %56 = sbr.rel (0) target = $region33
    $region32: #{tpu_custom_call.1} parent=1 // pred_region
      %57 = dma.done [#allocation6], 2048
    $region33: #{tpu_custom_call.1} parent=1 // pred_fallthru
      _
    %v58 = vld [vmem:[#allocation2] sm:$0xff]
    %v59 = vld [vmem:[#allocation5] sm:$0xff]
    %v60 = vld [vmem:[%s2] sm:$0x1]
    %v62 = vlaneseq
    %v63 = vshrl.u32 %v62, 7
    %v64 = vsub.s32 0, %v63
    %v65 = vrot.slane %v60, %v64
    %vm67 = vcmask 64512
    %v69 = vsel %vm67, %v58, 0
    %71 = vmatprep.subr.mxu0 0.0
    %72 = vmatpush1.msra.mxu0 0.0
    %73 = vmatprep.subr.mxu0 0.0
    %74 = vmatpush1.msra.mxu0 0.0
    %75 = vmatprep.subr.mxu0 0.0
    %76 = vmatpush1.msra.mxu0 0.0
    %77 = vmatprep.subr.mxu0 0.0
    %78 = vmatpush1.msra.mxu0 0.0
    %79 = vmatprep.subr.mxu0 0.0
    %80 = vmatpush1.msra.mxu0 0.0
    %81 = vmatprep.subr.mxu0 0.0
    %82 = vmatpush1.msra.mxu0 0.0
    %83 = vmatprep.subr.mxu0 0.0
    %84 = vmatpush1.msra.mxu0 0.0
    %85 = vmatprep.subr.mxu0 0.0
    %86 = vmatpush1.msra.mxu0 0.0
    %87 = vmatprep.subr.mxu0 0.0
    %88 = vmatpush1.msra.mxu0 0.0
    %89 = vmatprep.subr.mxu0 0.0
    %90 = vmatpush1.msra.mxu0 0.0
    %91 = vmatprep.subr.mxu0 0.0
    %92 = vmatpush1.msra.mxu0 0.0
    %93 = vmatprep.subr.mxu0 0.0
    %94 = vmatpush1.msra.mxu0 0.0
    %95 = vmatprep.subr.mxu0 0.0
    %96 = vmatpush1.msra.mxu0 0.0
    %97 = vmatprep.subr.mxu0 0.0
    %98 = vmatpush1.msra.mxu0 0.0
    %99 = vmatprep.subr.mxu0 0.0
    %100 = vmatpush1.msra.mxu0 0.0
    %101 = vmatprep.subr.mxu0 0.0
    %102 = vmatpush1.msra.mxu0 %v59
    %103 = vmatprep.subr.mxu0 0.0
    %104 = vmatpush2.msra.mxu0 0.0
    %105 = vmatprep.subr.mxu0 0.0
    %106 = vmatpush2.msra.mxu0 0.0
    %107 = vmatprep.subr.mxu0 0.0
    %108 = vmatpush2.msra.mxu0 0.0
    %109 = vmatprep.subr.mxu0 0.0
    %110 = vmatpush2.msra.mxu0 0.0
    %111 = vmatprep.subr.mxu0 0.0
    %112 = vmatpush2.msra.mxu0 0.0
    %113 = vmatprep.subr.mxu0 0.0
    %114 = vmatpush2.msra.mxu0 0.0
    %115 = vmatprep.subr.mxu0 0.0
    %116 = vmatpush2.msra.mxu0 0.0
    %117 = vmatprep.subr.mxu0 0.0
    %118 = vmatpush2.msra.mxu0 0.0
    %119 = vmatprep.subr.mxu0 0.0
    %120 = vmatpush2.msra.mxu0 0.0
    %121 = vmatprep.subr.mxu0 0.0
    %122 = vmatpush2.msra.mxu0 0.0
    %123 = vmatprep.subr.mxu0 0.0
    %124 = vmatpush2.msra.mxu0 0.0
    %125 = vmatprep.subr.mxu0 0.0
    %126 = vmatpush2.msra.mxu0 0.0
    %127 = vmatprep.subr.mxu0 0.0
    %128 = vmatpush2.msra.mxu0 0.0
    %129 = vmatprep.subr.mxu0 0.0
    %130 = vmatpush2.msra.mxu0 0.0
    %131 = vmatprep.subr.mxu0 0.0
    %132 = vmatpush2.msra.mxu0 0.0
    %133 = vmatprep.subr.mxu0 0.0
    %134 = vmatpush2.msra.mxu0 0.0
    %135 = vmatprep.mubr.f32.mxu0 0.0
    %136 = vmatmul.mubr.f32.gmra.mxu0 %v69
    %v137 = vpop.f32.mrf.mxu0
    %v138 = vadd.f32 %v65, %v137
    %v139 = vpop.f32.mrf.mxu0
    %140 = vdwg.mxu0
    %v141 = vmax.f32 %v138, 0.0
    %v142 = vld [vmem:[#allocation7] sm:$0xff]
    %v143 = vld [vmem:[#allocation7 + $0x8] sm:$0xff]
    %v144 = vld [vmem:[#allocation7 + $0x10] sm:$0xff]
    %v145 = vld [vmem:[#allocation7 + $0x18] sm:$0xff]
    %v146 = vld [vmem:[#allocation7 + $0x20] sm:$0xff]
    %v147 = vld [vmem:[#allocation7 + $0x28] sm:$0xff]
    %v148 = vld [vmem:[#allocation7 + $0x30] sm:$0xff]
    %v149 = vld [vmem:[#allocation7 + $0x38] sm:$0xff]
    %v150 = vld [vmem:[#allocation7 + $0x40] sm:$0xff]
    %v151 = vld [vmem:[#allocation7 + $0x48] sm:$0xff]
    %v152 = vld [vmem:[#allocation7 + $0x50] sm:$0xff]
    %v153 = vld [vmem:[#allocation7 + $0x58] sm:$0xff]
    %v154 = vld [vmem:[#allocation7 + $0x60] sm:$0xff]
    %v155 = vld [vmem:[#allocation7 + $0x68] sm:$0xff]
    %v156 = vld [vmem:[#allocation7 + $0x70] sm:$0xff]
    %v157 = vld [vmem:[#allocation7 + $0x78] sm:$0xff]
    %v158 = vld [vmem:[%s4] sm:$0x1]
    %v160 = vlaneseq
    %v161 = vshrl.u32 %v160, 7
    %v162 = vsub.s32 0, %v161
    %v163 = vrot.slane %v158, %v162
    %165 = vmatprep.subr.mxu0 0.0
    %166 = vmatpush1.msra.mxu0 %v157
    %167 = vmatprep.subr.mxu0 0.0
    %168 = vmatpush1.msra.mxu0 %v156
    %169 = vmatprep.subr.mxu0 0.0
    %170 = vmatpush1.msra.mxu0 %v155
    %171 = vmatprep.subr.mxu0 0.0
    %172 = vmatpush1.msra.mxu0 %v154
    %173 = vmatprep.subr.mxu0 0.0
    %174 = vmatpush1.msra.mxu0 %v153
    %175 = vmatprep.subr.mxu0 0.0
    %176 = vmatpush1.msra.mxu0 %v152
    %177 = vmatprep.subr.mxu0 0.0
    %178 = vmatpush1.msra.mxu0 %v151
    %179 = vmatprep.subr.mxu0 0.0
    %180 = vmatpush1.msra.mxu0 %v150
    %181 = vmatprep.subr.mxu0 0.0
    %182 = vmatpush1.msra.mxu0 %v149
    %183 = vmatprep.subr.mxu0 0.0
    %184 = vmatpush1.msra.mxu0 %v148
    %185 = vmatprep.subr.mxu0 0.0
    %186 = vmatpush1.msra.mxu0 %v147
    %187 = vmatprep.subr.mxu0 0.0
    %188 = vmatpush1.msra.mxu0 %v146
    %189 = vmatprep.subr.mxu0 0.0
    %190 = vmatpush1.msra.mxu0 %v145
    %191 = vmatprep.subr.mxu0 0.0
    %192 = vmatpush1.msra.mxu0 %v144
    %193 = vmatprep.subr.mxu0 0.0
    %194 = vmatpush1.msra.mxu0 %v143
    %195 = vmatprep.subr.mxu0 0.0
    %196 = vmatpush1.msra.mxu0 %v142
    %197 = vmatprep.subr.mxu0 0.0
    %198 = vmatpush2.msra.mxu0 0.0
    %199 = vmatprep.subr.mxu0 0.0
    %200 = vmatpush2.msra.mxu0 0.0
    %201 = vmatprep.subr.mxu0 0.0
    %202 = vmatpush2.msra.mxu0 0.0
    %203 = vmatprep.subr.mxu0 0.0
    %204 = vmatpush2.msra.mxu0 0.0
    %205 = vmatprep.subr.mxu0 0.0
    %206 = vmatpush2.msra.mxu0 0.0
    %207 = vmatprep.subr.mxu0 0.0
    %208 = vmatpush2.msra.mxu0 0.0
    %209 = vmatprep.subr.mxu0 0.0
    %210 = vmatpush2.msra.mxu0 0.0
    %211 = vmatprep.subr.mxu0 0.0
    %212 = vmatpush2.msra.mxu0 0.0
    %213 = vmatprep.subr.mxu0 0.0
    %214 = vmatpush2.msra.mxu0 0.0
    %215 = vmatprep.subr.mxu0 0.0
    %216 = vmatpush2.msra.mxu0 0.0
    %217 = vmatprep.subr.mxu0 0.0
    %218 = vmatpush2.msra.mxu0 0.0
    %219 = vmatprep.subr.mxu0 0.0
    %220 = vmatpush2.msra.mxu0 0.0
    %221 = vmatprep.subr.mxu0 0.0
    %222 = vmatpush2.msra.mxu0 0.0
    %223 = vmatprep.subr.mxu0 0.0
    %224 = vmatpush2.msra.mxu0 0.0
    %225 = vmatprep.subr.mxu0 0.0
    %226 = vmatpush2.msra.mxu0 0.0
    %227 = vmatprep.subr.mxu0 0.0
    %228 = vmatpush2.msra.mxu0 0.0
    %229 = vmatprep.mubr.f32.mxu0 0.0
    %230 = vmatmul.mubr.f32.gmra.mxu0 %v141
    %v231 = vpop.f32.mrf.mxu0
    %v232 = vadd.f32 %v163, %v231
    %v233 = vpop.f32.mrf.mxu0
    %234 = vdwg.mxu0
    %235 = vst [vmem:[#allocation8] sm:$0xff] %v232
    // Predicated region
    $region34: #{tpu_custom_call.1} parent=1 // pred_check
      _
    $region35: #{tpu_custom_call.1} parent=1 // pred_check_branch
      %237 = sbr.rel (0) target = $region37
    $region36: #{tpu_custom_call.1} parent=1 // pred_region
      %s239 = ssub.s32 128, 128
      %240 = vsyncadd [#allocation4], %s239
      %s242 = sshll.u32 [#allocation8], 4
      %s243 = int_to_ptr.vmem [resolvable:$true] %s242
      %245 = dma.vmem_to_hbm [thread:$0]  %s243, 128, %s5, [#allocation4]
    $region37: #{tpu_custom_call.1} parent=1 // pred_fallthru
      _
    // Predicated region
    $region38: #{tpu_custom_call.1} parent=1 // pred_check
      _
    $region39: #{tpu_custom_call.1} parent=1 // pred_check_branch
      %247 = sbr.rel (0) target = $region41
    $region40: #{tpu_custom_call.1} parent=1 // pred_region
      %248 = dma.done [#allocation4], 128
    $region41: #{tpu_custom_call.1} parent=1 // pred_fallthru
      _
    %249 = vsyncpa [#allocation3], 1
    %250 = vsyncpa [#allocation6], 1
    %251 = vsyncpa [#allocation4], 1

</llo_original>
